<compile_context>
chip_gen: v5e
topology: v5e:2x2
jax: 0.10.0
libtpu: 0.0.40
codegen_flags: <defaults>
</compile_context>

<pallas_src>
import functools

import jax
import jax.numpy as jnp
from jax.experimental import pallas as pl
from jax.experimental.pallas import tpu as pltpu


def _round_up(x, m):
    return ((x + m - 1) // m) * m


# ----------------------------------------------------------------------------
# Pallas kernel: fused 1x1 conv -> LeakyReLU -> 1x1 conv -> channel-wise act
# Blocks: x (Bblk, Cin, T), out (Bblk, Cout_pad, T); T (lanes) multiple of 128.
# ----------------------------------------------------------------------------
def _pred_head_kernel(x_ref, w1_ref, b1_ref, w2_ref, b2_ref, sel_ref, shift_ref,
                      o_ref, *, leaky_slope):
    # NOTE: on v5e with very large in_dim, casting w1/w2/x to bf16 here (while
    # keeping preferred_element_type=f32) keeps the kernel HBM-bound.
    w1 = w1_ref[...]                     # (hidden, Cin)
    b1 = b1_ref[...]                     # (hidden, 1)
    w2 = w2_ref[...]                     # (Cout_pad, hidden)
    b2 = b2_ref[...]                     # (Cout_pad, 1)
    sel = sel_ref[...]                   # (Cout_pad, 1): 1.0 where sigmoid applies
    shift = shift_ref[...]               # (Cout_pad, 1): -0.5 on dx/dy rows

    for bi in range(x_ref.shape[0]):     # static, small batch-fold loop
        x = x_ref[bi]                                                 # (Cin, T)
        h = jnp.dot(w1, x, preferred_element_type=jnp.float32) + b1  # (hid, T)
        h = jnp.maximum(h, leaky_slope * h)                          # LeakyReLU
        y = jnp.dot(w2, h, preferred_element_type=jnp.float32) + b2  # (Cout, T)
        # conf rows: sigmoid(y); dx/dy rows: sigmoid(y) - 0.5; others: identity
        y = y + sel * (jax.nn.sigmoid(y) + shift - y)
        o_ref[bi] = y.astype(o_ref.dtype)


def _vmem_act_budget():
    """Bytes of VMEM to spend on double-buffered activation blocks."""
    try:
        cap = pltpu.get_tpu_info().vmem_capacity_bytes
    except Exception:
        cap = 64 * 1024 * 1024           # assume the smallest (v7x) if unknown
    return min(48 * 1024 * 1024, cap // 3)


def _run_pred_head(x3, w1, b1, w2, b2, sel, shift):
    """x3: (B, Cin, HW) f32 -> (B, Cout_pad, HWp) f32, post-processed in-kernel."""
    B, cin, HW = x3.shape
    hidden = w1.shape[0]
    cout = w2.shape[0]                   # already padded to a multiple of 8

    budget = _vmem_act_budget()
    # Double-buffered activation bytes per spatial column at Bblk = 1.
    col_bytes = 2 * 4 * (cin + cout)
    # Largest lane-aligned spatial tile within budget; then pick the tile that
    # minimizes padding for the resulting number of spatial steps.
    t_cap = max(128, (budget // col_bytes) // 128 * 128)
    hw128 = _round_up(HW, 128)
    ns = pl.cdiv(hw128, t_cap)
    t = _round_up(pl.cdiv(hw128, ns), 128)
    HWp = ns * t

    # Fold several batch items per grid step for tiny feature maps, but keep
    # at least 2 grid cells so both v7x TensorCores stay busy.
    bblk = 1
    if ns == 1 and B > 1:
        max_fold = max(1, min(B // 2, budget // (col_bytes * t)))
        for d in range(max_fold, 0, -1):
            if B % d == 0:
                bblk = d
                break

    if HWp != HW:
        x3 = jnp.pad(x3, ((0, 0), (0, 0), (0, HWp - HW)))

    # vmem_limit from actual usage (+ margin) -- keeps v7x (64 MiB VMEM) safe
    # while still allowing large spatial tiles on v5e/v6e.
    act_bytes = 2 * 4 * bblk * t * (cin + cout)
    w_bytes = 2 * 4 * hidden * (cin + cout)
    vec_bytes = 2 * 4 * 128 * (hidden + 3 * cout)   # (N,1) vectors pad to 128 lanes
    vmem_limit = int(1.25 * (act_bytes + w_bytes + vec_bytes)) + (4 << 20)
    vmem_limit = max(32 << 20, min(100 << 20, vmem_limit))

    kernel = functools.partial(_pred_head_kernel, leaky_slope=0.01)

    out = pl.pallas_call(
        kernel,
        out_shape=jax.ShapeDtypeStruct((B, cout, HWp), jnp.float32),
        grid_spec=pltpu.PrefetchScalarGridSpec(
            num_scalar_prefetch=0,
            grid=(B // bblk, ns),
            in_specs=[
                pl.BlockSpec((bblk, cin, t), lambda b, s: (b, 0, s)),   # x
                pl.BlockSpec((hidden, cin), lambda b, s: (0, 0)),       # w1
                pl.BlockSpec((hidden, 1), lambda b, s: (0, 0)),         # b1
                pl.BlockSpec((cout, hidden), lambda b, s: (0, 0)),      # w2
                pl.BlockSpec((cout, 1), lambda b, s: (0, 0)),           # b2
                pl.BlockSpec((cout, 1), lambda b, s: (0, 0)),           # sel
                pl.BlockSpec((cout, 1), lambda b, s: (0, 0)),           # shift
            ],
            out_specs=pl.BlockSpec((bblk, cout, t), lambda b, s: (b, 0, s)),
        ),
        compiler_params=pltpu.CompilerParams(
            dimension_semantics=("parallel", "parallel"),
            vmem_limit_bytes=vmem_limit),
    )(x3, w1, b1, w2, b2, sel, shift)
    return out


# ----------------------------------------------------------------------------
# Module wrapper (parameter setup + glue slices / gathers in plain JAX)
# ----------------------------------------------------------------------------
class PredictionNetwork:
    def __init__(self, in_dim, hidden_dim=128, num_anchors=9, num_classes=20,
                 drop_ratio=0.3, key=None):
        assert num_classes != 0 and num_anchors != 0
        self.num_classes = num_classes
        self.num_anchors = num_anchors
        self.hidden_dim = hidden_dim
        self.in_dim = in_dim
        A = num_anchors
        out_dim = 5 * A + num_classes
        self.out_dim = out_dim
        cout_pad = _round_up(out_dim, 8)          # sublane-aligned channel count
        self.cout_pad = cout_pad

        if key is None:
            key = jax.random.PRNGKey(0)
        k1, k2, k3, k4 = jax.random.split(key, 4)
        # Conv2d(in_dim, hidden, 1): weight (hidden, in_dim, 1, 1) -> (hidden, in_dim)
        s1 = 1.0 / jnp.sqrt(in_dim)
        self.w1 = (jax.random.uniform(k1, (hidden_dim, in_dim),
                                      minval=-1.0, maxval=1.0) * s1).astype(jnp.float32)
        self.b1 = (jax.random.uniform(k2, (hidden_dim, 1),
                                      minval=-1.0, maxval=1.0) * s1).astype(jnp.float32)
        # Conv2d(hidden, out_dim, 1): weight (out_dim, hidden, 1, 1) -> (out_dim, hidden)
        s2 = 1.0 / jnp.sqrt(hidden_dim)
        w2 = (jax.random.uniform(k3, (out_dim, hidden_dim),
                                 minval=-1.0, maxval=1.0) * s2).astype(jnp.float32)
        b2 = (jax.random.uniform(k4, (out_dim, 1),
                                 minval=-1.0, maxval=1.0) * s2).astype(jnp.float32)

        # Permute output channels once at init so the kernel directly emits
        #   [conf(A) | (dx,dy,dw,dh) per anchor | classes(C) | zero pad].
        # perm[new_channel] = original_channel of the PyTorch layout
        # ([conf,dx,dy,dw,dh] * A, then classes).
        perm = ([5 * a for a in range(A)]
                + [5 * a + 1 + r for a in range(A) for r in range(4)]
                + [5 * A + c for c in range(num_classes)])
        perm = jnp.asarray(perm, dtype=jnp.int32)
        self.w2p = jnp.zeros((cout_pad, hidden_dim), jnp.float32).at[:out_dim].set(w2[perm])
        self.b2p = jnp.zeros((cout_pad, 1), jnp.float32).at[:out_dim].set(b2[perm])

        # Per-channel post-processing vectors (new layout, padded rows inert):
        #   sel = 1.0 where sigmoid applies (conf + dx/dy), shift = -0.5 on dx/dy.
        sel = [0.0] * cout_pad
        shift = [0.0] * cout_pad
        for a in range(A):
            sel[a] = 1.0                                   # conf -> sigmoid
            sel[A + 4 * a + 0] = 1.0; shift[A + 4 * a + 0] = -0.5   # dx
            sel[A + 4 * a + 1] = 1.0; shift[A + 4 * a + 1] = -0.5   # dy
        self.sel = jnp.asarray(sel, jnp.float32).reshape(cout_pad, 1)
        self.shift = jnp.asarray(shift, jnp.float32).reshape(cout_pad, 1)

    def forward(self, features, pos_anchor_idx=None, neg_anchor_idx=None):
        # features: (B, in_dim, H, W) NCHW float32
        B, Cin, H, W = features.shape
        A = self.num_anchors
        C = self.num_classes
        HW = H * W

        x3 = features.reshape(B, Cin, HW)                  # free reshape
        y3 = _run_pred_head(x3, self.w1, self.b1, self.w2p, self.b2p,
                            self.sel, self.shift)          # (B, Cout_pad, HWp)

        if pos_anchor_idx is not None:
            # Direct index arithmetic into the kernel output (no transposed /
            # broadcast intermediates). anchor_idx enumerates (b, a, h, w).
            def split_idx(idx):
                b = idx // (A * HW)
                rem = idx % (A * HW)
                return b, rem // HW, rem % HW

            pb, pa, phw = split_idx(pos_anchor_idx)
            nb, na, nhw = split_idx(neg_anchor_idx)

            # conf channel for anchor a is channel a in the reordered layout
            pos_conf = y3[pb, pa, phw][:, None]
            neg_conf = y3[nb, na, nhw][:, None]
            conf_scores = jnp.concatenate((pos_conf, neg_conf), axis=0)  # (2M, 1)

            # offsets: channels A + 4*a + d, d in {dx,dy,dw,dh}
            off_ch = A + 4 * pa[:, None] + jnp.arange(4)[None, :]        # (M, 4)
            offsets = y3[pb[:, None], off_ch, phw[:, None]]              # (M, 4)

            # class scores: channels [5A, 5A+C)
            cls_ch = 5 * A + jnp.arange(C)[None, :]                      # (1, C)
            class_scores = y3[pb[:, None], cls_ch, phw[:, None]]         # (M, C)
        else:
            # Contiguous channel slices (no stride-5 gather, no [:, :, 1:]).
            conf_scores = y3[:, :A, :HW].reshape(B, A, H, W)
            offsets = y3[:, A:5 * A, :HW].reshape(B, A, 4, H, W)
            class_scores = y3[:, 5 * A:5 * A + C, :HW].reshape(B, C, H, W)

        return conf_scores, offsets, class_scores


# ----------------------------------------------------------------------------
if __name__ == "__main__":
    key = jax.random.PRNGKey(0)
    k_feat, k_params, k_idx = jax.random.split(key, 3)

    B, in_dim, H, W = 2, 4, 16, 16
    hidden_dim, num_anchors, num_classes = 32, 9, 20

    features = jax.random.normal(k_feat, (B, in_dim, H, W), dtype=jnp.float32)
    net = PredictionNetwork(in_dim, hidden_dim=hidden_dim,
                            num_anchors=num_anchors, num_classes=num_classes,
                            key=k_params)

    # Inference mode
    conf, offs, cls = net.forward(features)
    jax.block_until_ready((conf, offs, cls))
    assert conf.shape == (B, num_anchors, H, W)
    assert offs.shape == (B, num_anchors, 4, H, W)
    assert cls.shape == (B, num_classes, H, W)

    # Training mode (anchor extraction)
    M = 8
    total = B * num_anchors * H * W
    pos_idx = jax.random.randint(k_idx, (M,), 0, total, dtype=jnp.int32)
    neg_idx = (pos_idx + 7) % total
    conf_t, offs_t, cls_t = net.forward(features, pos_idx, neg_idx)
    jax.block_until_ready((conf_t, offs_t, cls_t))
    assert conf_t.shape == (2 * M, 1)
    assert offs_t.shape == (M, 4)
    assert cls_t.shape == (M, num_classes)

    print("KERNEL_OK")
</pallas_src>

<mosaic_0001>
module attributes {stable_mosaic.version = 11 : i64} {
  func.func @_pred_head_kernel(%arg0: i32, %arg1: i32, %arg2: memref<1x4x256xf32, #tpu.memory_space<vmem>>, %arg3: memref<32x4xf32, #tpu.memory_space<vmem>>, %arg4: memref<32x1xf32, #tpu.memory_space<vmem>>, %arg5: memref<72x32xf32, #tpu.memory_space<vmem>>, %arg6: memref<72x1xf32, #tpu.memory_space<vmem>>, %arg7: memref<72x1xf32, #tpu.memory_space<vmem>>, %arg8: memref<72x1xf32, #tpu.memory_space<vmem>>, %arg9: memref<1x72x256xf32, #tpu.memory_space<vmem>>) attributes {dimension_semantics = [#tpu.dimension_semantics<parallel>, #tpu.dimension_semantics<parallel>], iteration_bounds = array<i64: 2, 1>, scalar_prefetch = 0 : i64, scratch_operands = 0 : i64, tpu.core_type = #tpu.core_type<tc>, window_params = [{transform_indices = @transform_0, window_bounds = array<i64: 1, 4, 256>}, {pipeline_mode = #tpu.pipeline_mode<synchronous>, transform_indices = @transform_1, window_bounds = array<i64: 32, 4>}, {pipeline_mode = #tpu.pipeline_mode<synchronous>, transform_indices = @transform_2, window_bounds = array<i64: 32, 1>}, {pipeline_mode = #tpu.pipeline_mode<synchronous>, transform_indices = @transform_3, window_bounds = array<i64: 72, 32>}, {pipeline_mode = #tpu.pipeline_mode<synchronous>, transform_indices = @transform_4, window_bounds = array<i64: 72, 1>}, {pipeline_mode = #tpu.pipeline_mode<synchronous>, transform_indices = @transform_5, window_bounds = array<i64: 72, 1>}, {pipeline_mode = #tpu.pipeline_mode<synchronous>, transform_indices = @transform_6, window_bounds = array<i64: 72, 1>}, {transform_indices = @transform_7, window_bounds = array<i64: 1, 72, 256>}]} {
    %c0 = arith.constant 0 : index
    %c0_0 = arith.constant 0 : index
    %0 = vector.load %arg3[%c0, %c0_0] : memref<32x4xf32, #tpu.memory_space<vmem>>, vector<32x4xf32>
    %c0_1 = arith.constant 0 : index
    %c0_2 = arith.constant 0 : index
    %1 = vector.load %arg4[%c0_1, %c0_2] : memref<32x1xf32, #tpu.memory_space<vmem>>, vector<32x1xf32>
    %c0_3 = arith.constant 0 : index
    %c0_4 = arith.constant 0 : index
    %2 = vector.load %arg5[%c0_3, %c0_4] : memref<72x32xf32, #tpu.memory_space<vmem>>, vector<72x32xf32>
    %c0_5 = arith.constant 0 : index
    %c0_6 = arith.constant 0 : index
    %3 = vector.load %arg6[%c0_5, %c0_6] : memref<72x1xf32, #tpu.memory_space<vmem>>, vector<72x1xf32>
    %c0_7 = arith.constant 0 : index
    %c0_8 = arith.constant 0 : index
    %4 = vector.load %arg7[%c0_7, %c0_8] : memref<72x1xf32, #tpu.memory_space<vmem>>, vector<72x1xf32>
    %c0_9 = arith.constant 0 : index
    %c0_10 = arith.constant 0 : index
    %5 = vector.load %arg8[%c0_9, %c0_10] : memref<72x1xf32, #tpu.memory_space<vmem>>, vector<72x1xf32>
    %c0_11 = arith.constant 0 : index
    %c0_12 = arith.constant 0 : index
    %c0_13 = arith.constant 0 : index
    %6 = vector.load %arg2[%c0_11, %c0_12, %c0_13] : memref<1x4x256xf32, #tpu.memory_space<vmem>>, vector<1x4x256xf32>
    %7 = vector.shape_cast %6 : vector<1x4x256xf32> to vector<4x256xf32>
    %cst = arith.constant dense<0.000000e+00> : vector<32x256xf32>
    %8 = tpu.matmul %0, %7, %cst {dimension_numbers = #tpu.dot_dimension_numbers<[1], [0], [0], [1], [0, 0, 1, 1], [], []>} : vector<32x4xf32>, vector<4x256xf32>, vector<32x256xf32> -> vector<32x256xf32>
    %9 = vector.broadcast %1 : vector<32x1xf32> to vector<32x256xf32>
    %10 = arith.addf %8, %9 : vector<32x256xf32>
    %cst_14 = arith.constant 0.00999999977 : f32
    %11 = vector.broadcast %cst_14 : f32 to vector<32x256xf32>
    %12 = arith.mulf %11, %10 : vector<32x256xf32>
    %13 = arith.maximumf %10, %12 : vector<32x256xf32>
    %cst_15 = arith.constant dense<0.000000e+00> : vector<72x256xf32>
    %14 = tpu.matmul %2, %13, %cst_15 {dimension_numbers = #tpu.dot_dimension_numbers<[1], [0], [0], [1], [0, 0, 1, 1], [], []>} : vector<72x32xf32>, vector<32x256xf32>, vector<72x256xf32> -> vector<72x256xf32>
    %15 = vector.broadcast %3 : vector<72x1xf32> to vector<72x256xf32>
    %16 = arith.addf %14, %15 : vector<72x256xf32>
    %17 = arith.negf %16 : vector<72x256xf32>
    %18 = math.exp %17 : vector<72x256xf32>
    %cst_16 = arith.constant 1.000000e+00 : f32
    %19 = vector.broadcast %cst_16 : f32 to vector<72x256xf32>
    %20 = arith.addf %19, %18 : vector<72x256xf32>
    %21 = arith.divf %19, %20 : vector<72x256xf32>
    %22 = vector.broadcast %5 : vector<72x1xf32> to vector<72x256xf32>
    %23 = arith.addf %21, %22 : vector<72x256xf32>
    %24 = arith.subf %23, %16 : vector<72x256xf32>
    %25 = vector.broadcast %4 : vector<72x1xf32> to vector<72x256xf32>
    %26 = arith.mulf %25, %24 : vector<72x256xf32>
    %27 = arith.addf %16, %26 : vector<72x256xf32>
    %c0_17 = arith.constant 0 : index
    %c0_18 = arith.constant 0 : index
    %c0_19 = arith.constant 0 : index
    %28 = vector.load %arg9[%c0_17, %c0_18, %c0_19] : memref<1x72x256xf32, #tpu.memory_space<vmem>>, vector<1x72x256xf32>
    %29 = vector.shape_cast %28 : vector<1x72x256xf32> to vector<72x256xf32>
    %30 = vector.shape_cast %27 : vector<72x256xf32> to vector<1x72x256xf32>
    tpu.vector_store %arg9[%c0_17, %c0_18, %c0_19], %30 {strides = array<i32>} : memref<1x72x256xf32, #tpu.memory_space<vmem>>, vector<1x72x256xf32>,
    return
  }
  func.func @transform_0(%arg0: i32, %arg1: i32) -> (i32, i32, i32) {
    %c0_i32 = arith.constant 0 : i32
    %c0_i32_0 = arith.constant 0 : i32
    return %arg0, %c0_i32, %arg1 : i32, i32, i32
  }
  func.func @transform_1(%arg0: i32, %arg1: i32) -> (i32, i32) {
    %c0_i32 = arith.constant 0 : i32
    %c0_i32_0 = arith.constant 0 : i32
    %c0_i32_1 = arith.constant 0 : i32
    return %c0_i32, %c0_i32_0 : i32, i32
  }
  func.func @transform_2(%arg0: i32, %arg1: i32) -> (i32, i32) {
    %c0_i32 = arith.constant 0 : i32
    %c0_i32_0 = arith.constant 0 : i32
    %c0_i32_1 = arith.constant 0 : i32
    return %c0_i32, %c0_i32_0 : i32, i32
  }
  func.func @transform_3(%arg0: i32, %arg1: i32) -> (i32, i32) {
    %c0_i32 = arith.constant 0 : i32
    %c0_i32_0 = arith.constant 0 : i32
    %c0_i32_1 = arith.constant 0 : i32
    return %c0_i32, %c0_i32_0 : i32, i32
  }
  func.func @transform_4(%arg0: i32, %arg1: i32) -> (i32, i32) {
    %c0_i32 = arith.constant 0 : i32
    %c0_i32_0 = arith.constant 0 : i32
    %c0_i32_1 = arith.constant 0 : i32
    return %c0_i32, %c0_i32_0 : i32, i32
  }
  func.func @transform_5(%arg0: i32, %arg1: i32) -> (i32, i32) {
    %c0_i32 = arith.constant 0 : i32
    %c0_i32_0 = arith.constant 0 : i32
    %c0_i32_1 = arith.constant 0 : i32
    return %c0_i32, %c0_i32_0 : i32, i32
  }
  func.func @transform_6(%arg0: i32, %arg1: i32) -> (i32, i32) {
    %c0_i32 = arith.constant 0 : i32
    %c0_i32_0 = arith.constant 0 : i32
    %c0_i32_1 = arith.constant 0 : i32
    return %c0_i32, %c0_i32_0 : i32, i32
  }
  func.func @transform_7(%arg0: i32, %arg1: i32) -> (i32, i32, i32) {
    %c0_i32 = arith.constant 0 : i32
    %c0_i32_0 = arith.constant 0 : i32
    return %arg0, %c0_i32, %arg1 : i32, i32, i32
  }
}

</mosaic_0001>

<llo_original>
// kernel: tpu_custom_call.1
$region0: #{tpu_custom_call.1}
  #allocation0 [shape = 'u32[]', space=smem, size = 0x4, offset = 0x4, fixed_abs, tag = 'smem constant byte address 0x4 - core index']
  #allocation1 [shape = 'u32[72,128]{1,0:T(1,128)}', space=vmem, size = 0x9000, scoped, tag = 'internal scratch']
  %s0 = inlined_call_operand.vmem [shape: f32[2,4,256], index: 0, kind: input, shape index: {}]
  %s1 = inlined_call_operand.vmem [shape: f32[32,4], index: 1, kind: input, shape index: {}]
  %s2 = inlined_call_operand.vmem [shape: f32[32,1], index: 2, kind: input, shape index: {}]
  %s3 = inlined_call_operand.vmem [shape: f32[72,32], index: 3, kind: input, shape index: {}]
  %s4 = inlined_call_operand.vmem [shape: f32[72,1], index: 4, kind: input, shape index: {}]
  %s5 = inlined_call_operand.vmem [shape: f32[72,1], index: 5, kind: input, shape index: {}]
  %s6 = inlined_call_operand.vmem [shape: f32[72,1], index: 6, kind: input, shape index: {}]
  %s7 = inlined_call_operand.hbm [shape: f32[2,72,256], index: 7, kind: output, shape index: {}]
  %s8 = sld [smem:[#allocation0]]
  $region61: #{tpu_custom_call.1} parent=0
    _
  %s10 = ssub.s32 1, %s8
  %s11 = scalar_select 0, %s10, %s8
  $region1: #{tpu_custom_call.1} parent=0
    #allocation2 [shape = 'u8[147456]{0}', space=vmem, size = 0x24000, scoped, tag = 'output window, operand 0']
    #allocation3 [shape = 's32[2]{0}', space=sflag, size = 0x8, scoped, tag = 'scoped memory for tpu_custom_call.1']
    %12 = vsyncpa [#allocation3], 0
    %s13 = scalar_lea.sflag [#allocation3], 1
    %14 = vsyncpa %s13, 0
    loop: start=0, step=1, limit=4
    $region2: #{tpu_custom_call.1} parent=1 // loop_pre_header
      _
    $region3: #{tpu_custom_call.1} parent=1 // loop_header
      %s16 = sphi 0, %s20
      %p17 = scmp.ge.s32.totalorder %s16, 4
      %s23 = sphi 0, %s35
      %s24 = sphi 0, %s31
      %s25 = sphi 0, %s23
      %s26 = sphi 0, %s24
      %s27 = sphi 0, %s25
      %s28 = sphi 0, %s26
      %s40 = sphi 0, %s42
      %s43 = sphi 0, %s40
      %s44 = sphi 0, %s43
      %s60 = sphi 0, %s44
      %s64 = sphi 0, %s64
      %s66 = sphi 0, %s64
      %s67 = sphi 0, %s66
      %s81 = sphi 0, %s67
      %s85 = sphi 0, %s85
      %s87 = sphi 0, %s85
      %s88 = sphi 0, %s87
      %s102 = sphi 0, %s88
      %s106 = sphi 0, %s106
      %s108 = sphi 0, %s106
      %s109 = sphi 0, %s108
      %s123 = sphi 0, %s109
      %s127 = sphi 0, %s127
      %s129 = sphi 0, %s127
      %s130 = sphi 0, %s129
      %s144 = sphi 0, %s130
      %s148 = sphi 0, %s148
      %s150 = sphi 0, %s148
      %s151 = sphi 0, %s150
      %s165 = sphi 0, %s151
      %s169 = sphi 0, %s169
      %s171 = sphi 0, %s169
      %s172 = sphi 0, %s171
      %s186 = sphi 0, %s172
      %s194 = sphi 0, %s196
      %s197 = sphi 0, %s194
      %s198 = sphi 0, %s197
      %s214 = sphi 0, %s198
    $region4: #{tpu_custom_call.1} parent=1 // loop_header_branch
      %19 = sbr.rel (%p17) target = $region8
    $region5: #{tpu_custom_call.1} parent=1 // loop_body
      %s21 = ssub.s32 %s16, 1
      %s22 = ssub.s32 %s16, 2
      %s29 = sadd.s32 1, %s24
      %p30 = scmp.ge.s32.totalorder %s29, 1
      %s31 = scalar_select %p30, 0, %s29
      %s32 = sadd.s32 1, %s23
      %s33 = scalar_select %p30, %s32, %s23
      %p34 = scmp.ge.s32.totalorder %s33, 2
      %s35 = scalar_select %p34, 0, %s33
      %s36 = ssub.s32 %s23, %s35
      %s37 = ssub.s32 %s24, %s31
      %s38 = sor.u32 %s36, %s37
      %p39 = scmp.eq.s32.totalorder %s38, 0
      %s41 = sadd.s32 %s40, 1
      %s42 = scalar_select %p39, %s40, %s41
      %p45 = pneg %p39
      %p46 = scmp.eq.s32.totalorder %s16, 1
      %p47 = por %p45, %p46
      %p48 = scmp.ne.s32.totalorder %s40, %s43
      %p49 = scmp.eq.s32.totalorder %s16, 0
      %p50 = por %p48, %p49
      %p51 = scmp.ne.s32.totalorder %s40, %s43
      %p52 = scmp.eq.s32.totalorder %s21, 1
      %p53 = por %p51, %p52
      %p54 = scmp.ne.s32.totalorder %s43, %s44
      %p55 = scmp.eq.s32.totalorder %s21, 0
      %p56 = por %p54, %p55
      %p57 = scmp.ne.s32.totalorder %s43, %s44
      %p58 = scmp.eq.s32.totalorder %s22, 1
      %p59 = por %p57, %p58
      %p61 = scmp.ne.s32.totalorder %s44, %s60
      %p62 = scmp.eq.s32.totalorder %s22, 0
      %p63 = por %p61, %p62
      %s65 = sadd.s32 %s64, 1
      %p68 = scmp.eq.s32.totalorder %s16, 1
      %p69 = scmp.ne.s32.totalorder %s64, %s66
      %p70 = scmp.eq.s32.totalorder %s16, 0
      %p71 = por %p69, %p70
      %p72 = scmp.ne.s32.totalorder %s64, %s66
      %p73 = scmp.eq.s32.totalorder %s21, 1
      %p74 = por %p72, %p73
      %p75 = scmp.ne.s32.totalorder %s66, %s67
      %p76 = scmp.eq.s32.totalorder %s21, 0
      %p77 = por %p75, %p76
      %p78 = scmp.ne.s32.totalorder %s66, %s67
      %p79 = scmp.eq.s32.totalorder %s22, 1
      %p80 = por %p78, %p79
      %p82 = scmp.ne.s32.totalorder %s67, %s81
      %p83 = scmp.eq.s32.totalorder %s22, 0
      %p84 = por %p82, %p83
      %s86 = sadd.s32 %s85, 1
      %p89 = scmp.eq.s32.totalorder %s16, 1
      %p90 = scmp.ne.s32.totalorder %s85, %s87
      %p91 = scmp.eq.s32.totalorder %s16, 0
      %p92 = por %p90, %p91
      %p93 = scmp.ne.s32.totalorder %s85, %s87
      %p94 = scmp.eq.s32.totalorder %s21, 1
      %p95 = por %p93, %p94
      %p96 = scmp.ne.s32.totalorder %s87, %s88
      %p97 = scmp.eq.s32.totalorder %s21, 0
      %p98 = por %p96, %p97
      %p99 = scmp.ne.s32.totalorder %s87, %s88
      %p100 = scmp.eq.s32.totalorder %s22, 1
      %p101 = por %p99, %p100
      %p103 = scmp.ne.s32.totalorder %s88, %s102
      %p104 = scmp.eq.s32.totalorder %s22, 0
      %p105 = por %p103, %p104
      %s107 = sadd.s32 %s106, 1
      %p110 = scmp.eq.s32.totalorder %s16, 1
      %p111 = scmp.ne.s32.totalorder %s106, %s108
      %p112 = scmp.eq.s32.totalorder %s16, 0
      %p113 = por %p111, %p112
      %p114 = scmp.ne.s32.totalorder %s106, %s108
      %p115 = scmp.eq.s32.totalorder %s21, 1
      %p116 = por %p114, %p115
      %p117 = scmp.ne.s32.totalorder %s108, %s109
      %p118 = scmp.eq.s32.totalorder %s21, 0
      %p119 = por %p117, %p118
      %p120 = scmp.ne.s32.totalorder %s108, %s109
      %p121 = scmp.eq.s32.totalorder %s22, 1
      %p122 = por %p120, %p121
      %p124 = scmp.ne.s32.totalorder %s109, %s123
      %p125 = scmp.eq.s32.totalorder %s22, 0
      %p126 = por %p124, %p125
      %s128 = sadd.s32 %s127, 1
      %p131 = scmp.eq.s32.totalorder %s16, 1
      %p132 = scmp.ne.s32.totalorder %s127, %s129
      %p133 = scmp.eq.s32.totalorder %s16, 0
      %p134 = por %p132, %p133
      %p135 = scmp.ne.s32.totalorder %s127, %s129
      %p136 = scmp.eq.s32.totalorder %s21, 1
      %p137 = por %p135, %p136
      %p138 = scmp.ne.s32.totalorder %s129, %s130
      %p139 = scmp.eq.s32.totalorder %s21, 0
      %p140 = por %p138, %p139
      %p141 = scmp.ne.s32.totalorder %s129, %s130
      %p142 = scmp.eq.s32.totalorder %s22, 1
      %p143 = por %p141, %p142
      %p145 = scmp.ne.s32.totalorder %s130, %s144
      %p146 = scmp.eq.s32.totalorder %s22, 0
      %p147 = por %p145, %p146
      %s149 = sadd.s32 %s148, 1
      %p152 = scmp.eq.s32.totalorder %s16, 1
      %p153 = scmp.ne.s32.totalorder %s148, %s150
      %p154 = scmp.eq.s32.totalorder %s16, 0
      %p155 = por %p153, %p154
      %p156 = scmp.ne.s32.totalorder %s148, %s150
      %p157 = scmp.eq.s32.totalorder %s21, 1
      %p158 = por %p156, %p157
      %p159 = scmp.ne.s32.totalorder %s150, %s151
      %p160 = scmp.eq.s32.totalorder %s21, 0
      %p161 = por %p159, %p160
      %p162 = scmp.ne.s32.totalorder %s150, %s151
      %p163 = scmp.eq.s32.totalorder %s22, 1
      %p164 = por %p162, %p163
      %p166 = scmp.ne.s32.totalorder %s151, %s165
      %p167 = scmp.eq.s32.totalorder %s22, 0
      %p168 = por %p166, %p167
      %s170 = sadd.s32 %s169, 1
      %p173 = scmp.eq.s32.totalorder %s16, 1
      %p174 = scmp.ne.s32.totalorder %s169, %s171
      %p175 = scmp.eq.s32.totalorder %s16, 0
      %p176 = por %p174, %p175
      %p177 = scmp.ne.s32.totalorder %s169, %s171
      %p178 = scmp.eq.s32.totalorder %s21, 1
      %p179 = por %p177, %p178
      %p180 = scmp.ne.s32.totalorder %s171, %s172
      %p181 = scmp.eq.s32.totalorder %s21, 0
      %p182 = por %p180, %p181
      %p183 = scmp.ne.s32.totalorder %s171, %s172
      %p184 = scmp.eq.s32.totalorder %s22, 1
      %p185 = por %p183, %p184
      %p187 = scmp.ne.s32.totalorder %s172, %s186
      %p188 = scmp.eq.s32.totalorder %s22, 0
      %p189 = por %p187, %p188
      %s190 = ssub.s32 %s23, %s35
      %s191 = ssub.s32 %s24, %s31
      %s192 = sor.u32 %s190, %s191
      %p193 = scmp.eq.s32.totalorder %s192, 0
      %s195 = sadd.s32 %s194, 1
      %s196 = scalar_select %p193, %s194, %s195
      %p199 = pneg %p193
      %p200 = scmp.eq.s32.totalorder %s16, 1
      %p201 = por %p199, %p200
      %p202 = scmp.ne.s32.totalorder %s194, %s197
      %p203 = scmp.eq.s32.totalorder %s16, 0
      %p204 = por %p202, %p203
      %p205 = scmp.ne.s32.totalorder %s194, %s197
      %p206 = scmp.eq.s32.totalorder %s21, 1
      %p207 = por %p205, %p206
      %p208 = scmp.ne.s32.totalorder %s197, %s198
      %p209 = scmp.eq.s32.totalorder %s21, 0
      %p210 = por %p208, %p209
      %p211 = scmp.ne.s32.totalorder %s197, %s198
      %p212 = scmp.eq.s32.totalorder %s22, 1
      %p213 = por %p211, %p212
      %p215 = scmp.ne.s32.totalorder %s198, %s214
      %p216 = scmp.eq.s32.totalorder %s22, 0
      %p217 = por %p215, %p216
      %p218 = scmp.le.s32.totalorder 1, %s16
      %p219 = scmp.lt.s32.totalorder %s16, 3
      %p220 = pnand %p218, %p219
      %p221 = pneg %p220
      // Predicated region
      $region9: #{tpu_custom_call.1} parent=5 // pred_check
        _
      $region10: #{tpu_custom_call.1} parent=5 // pred_check_branch
        %223 = sbr.rel (%p220) target = $region12
      $region11: #{tpu_custom_call.1} parent=5 // pred_region
        %s224 = ssub.s32 %s16, 1
        // Predicated region
        $region13: #{tpu_custom_call.1} parent=11 // pred_check
          %p225 = pneg %p77
        $region14: #{tpu_custom_call.1} parent=11 // pred_check_branch
          %227 = sbr.rel (%p225) target = $region16
        $region15: #{tpu_custom_call.1} parent=11 // pred_region
          _
        $region16: #{tpu_custom_call.1} parent=11 // pred_fallthru
          _
        // Predicated region
        $region17: #{tpu_custom_call.1} parent=11 // pred_check
          %p228 = pneg %p98
        $region18: #{tpu_custom_call.1} parent=11 // pred_check_branch
          %230 = sbr.rel (%p228) target = $region20
        $region19: #{tpu_custom_call.1} parent=11 // pred_region
          _
        $region20: #{tpu_custom_call.1} parent=11 // pred_fallthru
          _
        // Predicated region
        $region21: #{tpu_custom_call.1} parent=11 // pred_check
          %p231 = pneg %p119
        $region22: #{tpu_custom_call.1} parent=11 // pred_check_branch
          %233 = sbr.rel (%p231) target = $region24
        $region23: #{tpu_custom_call.1} parent=11 // pred_region
          _
        $region24: #{tpu_custom_call.1} parent=11 // pred_fallthru
          _
        // Predicated region
        $region25: #{tpu_custom_call.1} parent=11 // pred_check
          %p234 = pneg %p140
        $region26: #{tpu_custom_call.1} parent=11 // pred_check_branch
          %236 = sbr.rel (%p234) target = $region28
        $region27: #{tpu_custom_call.1} parent=11 // pred_region
          _
        $region28: #{tpu_custom_call.1} parent=11 // pred_fallthru
          _
        // Predicated region
        $region29: #{tpu_custom_call.1} parent=11 // pred_check
          %p237 = pneg %p161
        $region30: #{tpu_custom_call.1} parent=11 // pred_check_branch
          %239 = sbr.rel (%p237) target = $region32
        $region31: #{tpu_custom_call.1} parent=11 // pred_region
          _
        $region32: #{tpu_custom_call.1} parent=11 // pred_fallthru
          _
        // Predicated region
        $region33: #{tpu_custom_call.1} parent=11 // pred_check
          %p240 = pneg %p182
        $region34: #{tpu_custom_call.1} parent=11 // pred_check_branch
          %242 = sbr.rel (%p240) target = $region36
        $region35: #{tpu_custom_call.1} parent=11 // pred_region
          _
        $region36: #{tpu_custom_call.1} parent=11 // pred_fallthru
          _
      $region12: #{tpu_custom_call.1} parent=5 // pred_fallthru
        _
      %p243 = scmp.lt.s32.totalorder %s16, 2
      // Predicated region
      $region37: #{tpu_custom_call.1} parent=5 // pred_check
        %p244 = pneg %p243
      $region38: #{tpu_custom_call.1} parent=5 // pred_check_branch
        %246 = sbr.rel (%p244) target = $region40
      $region39: #{tpu_custom_call.1} parent=5 // pred_region
        // Predicated region
        $region41: #{tpu_custom_call.1} parent=39 // pred_check
          %p247 = pneg %p50
        $region42: #{tpu_custom_call.1} parent=39 // pred_check_branch
          %249 = sbr.rel (%p247) target = $region44
        $region43: #{tpu_custom_call.1} parent=39 // pred_region
          %s250 = smul.u32 2, %s24
          %p251 = scmp.lt.s32.totalorder %s23, 1
          %s252 = scalar_select %p251, %s23, 1
          %p253 = scmp.lt.s32.totalorder %s250, 1
          %s254 = scalar_select %p253, %s250, 1
          %s255 = smul.addr %s252, 2
          %s256 = sadd.s32 %s254, %s255
          %s257 = smul.addr %s256, 4
          %s258 = scalar_lea.vmem %s0, %s257
          %s259 = smul.u32 2, %s24
        $region44: #{tpu_custom_call.1} parent=39 // pred_fallthru
          _
      $region40: #{tpu_custom_call.1} parent=5 // pred_fallthru
        _
      %p260 = scmp.le.s32.totalorder 1, %s16
      %p261 = scmp.lt.s32.totalorder %s16, 3
      %p262 = pnand %p260, %p261
      %p263 = pneg %p262
      // Predicated region
      $region45: #{tpu_custom_call.1} parent=5 // pred_check
        _
      $region46: #{tpu_custom_call.1} parent=5 // pred_check_branch
        %265 = sbr.rel (%p262) target = $region48
      $region47: #{tpu_custom_call.1} parent=5 // pred_region
        %s266 = ssub.s32 %s16, 1
        %s267 = smul.u32 2, %s26
        %p268 = scmp.lt.s32.totalorder %s25, 1
        %s269 = scalar_select %p268, %s25, 1
        %p270 = scmp.lt.s32.totalorder %s267, 1
        %s271 = scalar_select %p270, %s267, 1
        %s272 = smul.addr %s269, 2
        %s273 = sadd.s32 %s271, %s272
        %s274 = smul.addr %s273, 4
        %s275 = scalar_lea.vmem %s0, %s274
        %p276 = pneg %p56
        %p277 = pneg %p53
        %p278 = pneg %p77
        %p279 = pneg %p74
        %p280 = pneg %p98
        %p281 = pneg %p95
        %p282 = pneg %p119
        %p283 = pneg %p116
        %p284 = pneg %p140
        %p285 = pneg %p137
        %p286 = pneg %p161
        %p287 = pneg %p158
        %p288 = pneg %p182
        %p289 = pneg %p179
        %p290 = pneg %p210
        %p291 = pneg %p207
        %s292 = sand.u32 %s197, 1
        %s293 = scalar_lea.sflag [#allocation3], %s292
        %s294 = sand.u32 %s197, 1
        %s295 = smul.addr %s294, 144
        %s296 = scalar_lea.vmem [#allocation2], %s295
        %s297 = smul.u32 2, %s26
        %p298 = scmp.lt.s32.totalorder %s25, 1
        %s299 = scalar_select %p298, %s25, 1
        %p300 = scmp.lt.s32.totalorder %s297, 1
        %s301 = scalar_select %p300, %s297, 1
        %s302 = smul.addr %s299, 2
        %s303 = sadd.s32 %s301, %s302
        %s304 = smul.addr %s303, 4
        %s305 = scalar_lea.vmem %s0, %s304
        %s306 = smul.u32 2, %s26
        %s307 = smul.u32 2, %s26
        %v308 = vld [vmem:[%s1] sm:$0xff]
        %v309 = vld [vmem:[%s1 + $0x8] sm:$0xff]
        %v310 = vld [vmem:[%s1 + $0x10] sm:$0xff]
        %v311 = vld [vmem:[%s1 + $0x18] sm:$0xff]
        %v312 = vld [vmem:[%s2] sm:$0xff]
        %v313 = vld [vmem:[%s2 + $0x8] sm:$0xff]
        %v314 = vld [vmem:[%s2 + $0x10] sm:$0xff]
        %v315 = vld [vmem:[%s2 + $0x18] sm:$0xff]
        %v316 = vld [vmem:[%s3] sm:$0xff]
        %v317 = vld [vmem:[%s3 + $0x8] sm:$0xff]
        %v318 = vld [vmem:[%s3 + $0x10] sm:$0xff]
        %v319 = vld [vmem:[%s3 + $0x18] sm:$0xff]
        %v320 = vld [vmem:[%s3 + $0x20] sm:$0xff]
        %v321 = vld [vmem:[%s3 + $0x28] sm:$0xff]
        %v322 = vld [vmem:[%s3 + $0x30] sm:$0xff]
        %v323 = vld [vmem:[%s3 + $0x38] sm:$0xff]
        %v324 = vld [vmem:[%s3 + $0x40] sm:$0xff]
        %v325 = vld [vmem:[%s4] sm:$0xff]
        %v326 = vld [vmem:[%s4 + $0x8] sm:$0xff]
        %v327 = vld [vmem:[%s4 + $0x10] sm:$0xff]
        %v328 = vld [vmem:[%s4 + $0x18] sm:$0xff]
        %v329 = vld [vmem:[%s4 + $0x20] sm:$0xff]
        %v330 = vld [vmem:[%s4 + $0x28] sm:$0xff]
        %v331 = vld [vmem:[%s4 + $0x30] sm:$0xff]
        %v332 = vld [vmem:[%s4 + $0x38] sm:$0xff]
        %v333 = vld [vmem:[%s4 + $0x40] sm:$0xff]
        %v334 = vld [vmem:[%s5] sm:$0xff]
        %v335 = vld [vmem:[%s5 + $0x8] sm:$0xff]
        %v336 = vld [vmem:[%s5 + $0x10] sm:$0xff]
        %v337 = vld [vmem:[%s5 + $0x18] sm:$0xff]
        %v338 = vld [vmem:[%s5 + $0x20] sm:$0xff]
        %v339 = vld [vmem:[%s5 + $0x28] sm:$0xff]
        %v340 = vld [vmem:[%s5 + $0x30] sm:$0xff]
        %v341 = vld [vmem:[%s5 + $0x38] sm:$0xff]
        %v342 = vld [vmem:[%s5 + $0x40] sm:$0xff]
        %v343 = vld [vmem:[%s6] sm:$0xff]
        %v344 = vld [vmem:[%s6 + $0x8] sm:$0xff]
        %v345 = vld [vmem:[%s6 + $0x10] sm:$0xff]
        %v346 = vld [vmem:[%s6 + $0x18] sm:$0xff]
        %v347 = vld [vmem:[%s6 + $0x20] sm:$0xff]
        %v348 = vld [vmem:[%s6 + $0x28] sm:$0xff]
        %v349 = vld [vmem:[%s6 + $0x30] sm:$0xff]
        %v350 = vld [vmem:[%s6 + $0x38] sm:$0xff]
        %v351 = vld [vmem:[%s6 + $0x40] sm:$0xff]
        %v352 = vld [vmem:[%s305] sm:$0xff]
        %354 = vset.pattern.permute.xlu0 0
        %355 = vperm.xlu0 %354, %v312
        %v356 = vpop.permute.xlu0 %355
        %359 = vset.pattern.permute.xlu0 0
        %360 = vperm.xlu0 %359, %v313
        %v361 = vpop.permute.xlu0 %360
        %364 = vset.pattern.permute.xlu0 0
        %365 = vperm.xlu0 %364, %v314
        %v366 = vpop.permute.xlu0 %365
        %369 = vset.pattern.permute.xlu0 0
        %370 = vperm.xlu0 %369, %v315
        %v371 = vpop.permute.xlu0 %370
        %374 = vst [vmem:[#allocation1] ss:$2 sm:$0xff] %v352
        %v375 = vld.sshfl [vmem:[#allocation1] sm:$0xff pattern:$0x75316420]
        %v376 = vld.sshfl [vmem:[#allocation1 + $0x8] sm:$0xff pattern:$0x75316420]
        %vm377 = vcmask 31744
        %v379 = vsel %vm377, %v308, 0
        %v382 = vsel %vm377, %v309, 0
        %v385 = vsel %vm377, %v310, 0
        %v388 = vsel %vm377, %v311, 0
        %vm390 = vcmask 1043456
        %v391 = vsel %vm390, %v375, 0
        %v393 = vsel %vm390, %v376, 0
        %395 = vmatpush.msra.mxu0 0.0
        %396 = vmatpush.msra.mxu0 0.0
        %397 = vmatpush.msra.mxu0 0.0
        %398 = vmatpush.msra.mxu0 0.0
        %399 = vmatpush.msra.mxu0 0.0
        %400 = vmatpush.msra.mxu0 0.0
        %401 = vmatpush.msra.mxu0 0.0
        %402 = vmatpush.msra.mxu0 0.0
        %403 = vmatpush.msra.mxu0 0.0
        %404 = vmatpush.msra.mxu0 0.0
        %405 = vmatpush.msra.mxu0 0.0
        %406 = vmatpush.msra.mxu0 0.0
        %407 = vmatpush.msra.mxu0 0.0
        %408 = vmatpush.msra.mxu0 0.0
        %409 = vmatpush.msra.mxu0 0.0
        %410 = vmatpush.msra.mxu0 %v391
        %411 = vmatmul.f32.gmra.mxu0 %v379
        %v412 = vpop.f32.mrf.mxu0
        %v413 = vadd.f32 %v356, %v412
        %414 = vmatmul.f32.gmra.mxu0 %v382
        %v415 = vpop.f32.mrf.mxu0
        %v416 = vadd.f32 %v361, %v415
        %417 = vmatmul.f32.gmra.mxu0 %v385
        %v418 = vpop.f32.mrf.mxu0
        %v419 = vadd.f32 %v366, %v418
        %420 = vmatmul.f32.gmra.mxu0 %v388
        %v421 = vpop.f32.mrf.mxu0
        %v422 = vadd.f32 %v371, %v421
        %423 = vdwg.mxu0
        %424 = vmatpush.msra.mxu0 0.0
        %425 = vmatpush.msra.mxu0 0.0
        %426 = vmatpush.msra.mxu0 0.0
        %427 = vmatpush.msra.mxu0 0.0
        %428 = vmatpush.msra.mxu0 0.0
        %429 = vmatpush.msra.mxu0 0.0
        %430 = vmatpush.msra.mxu0 0.0
        %431 = vmatpush.msra.mxu0 0.0
        %432 = vmatpush.msra.mxu0 0.0
        %433 = vmatpush.msra.mxu0 0.0
        %434 = vmatpush.msra.mxu0 0.0
        %435 = vmatpush.msra.mxu0 0.0
        %436 = vmatpush.msra.mxu0 0.0
        %437 = vmatpush.msra.mxu0 0.0
        %438 = vmatpush.msra.mxu0 0.0
        %439 = vmatpush.msra.mxu0 %v393
        %440 = vmatmul.f32.gmra.mxu0 %v379
        %v441 = vpop.f32.mrf.mxu0
        %v442 = vadd.f32 %v356, %v441
        %443 = vmatmul.f32.gmra.mxu0 %v382
        %v444 = vpop.f32.mrf.mxu0
        %v445 = vadd.f32 %v361, %v444
        %446 = vmatmul.f32.gmra.mxu0 %v385
        %v447 = vpop.f32.mrf.mxu0
        %v448 = vadd.f32 %v366, %v447
        %449 = vmatmul.f32.gmra.mxu0 %v388
        %v450 = vpop.f32.mrf.mxu0
        %v451 = vadd.f32 %v371, %v450
        %452 = vdwg.mxu0
        %v453 = vmul.f32 %v413, 0.01
        %v454 = vmul.f32 %v442, 0.01
        %v455 = vmul.f32 %v416, 0.01
        %v456 = vmul.f32 %v445, 0.01
        %v457 = vmul.f32 %v419, 0.01
        %v458 = vmul.f32 %v448, 0.01
        %v459 = vmul.f32 %v422, 0.01
        %v460 = vmul.f32 %v451, 0.01
        %v461 = vmax.f32 %v413, %v453
        %v462 = vmax.f32 %v442, %v454
        %v463 = vmax.f32 %v416, %v455
        %v464 = vmax.f32 %v445, %v456
        %v465 = vmax.f32 %v419, %v457
        %v466 = vmax.f32 %v448, %v458
        %v467 = vmax.f32 %v422, %v459
        %v468 = vmax.f32 %v451, %v460
        %470 = vset.pattern.permute.xlu0 0
        %471 = vperm.xlu0 %470, %v325
        %v472 = vpop.permute.xlu0 %471
        %475 = vset.pattern.permute.xlu0 0
        %476 = vperm.xlu0 %475, %v326
        %v477 = vpop.permute.xlu0 %476
        %480 = vset.pattern.permute.xlu0 0
        %481 = vperm.xlu0 %480, %v327
        %v482 = vpop.permute.xlu0 %481
        %485 = vset.pattern.permute.xlu0 0
        %486 = vperm.xlu0 %485, %v328
        %v487 = vpop.permute.xlu0 %486
        %490 = vset.pattern.permute.xlu0 0
        %491 = vperm.xlu0 %490, %v329
        %v492 = vpop.permute.xlu0 %491
        %495 = vset.pattern.permute.xlu0 0
        %496 = vperm.xlu0 %495, %v330
        %v497 = vpop.permute.xlu0 %496
        %500 = vset.pattern.permute.xlu0 0
        %501 = vperm.xlu0 %500, %v331
        %v502 = vpop.permute.xlu0 %501
        %505 = vset.pattern.permute.xlu0 0
        %506 = vperm.xlu0 %505, %v332
        %v507 = vpop.permute.xlu0 %506
        %510 = vset.pattern.permute.xlu0 0
        %511 = vperm.xlu0 %510, %v333
        %v512 = vpop.permute.xlu0 %511
        %vm514 = vcmask 261120
        %v516 = vsel %vm514, %v316, 0
        %v519 = vsel %vm514, %v317, 0
        %v522 = vsel %vm514, %v318, 0
        %v525 = vsel %vm514, %v319, 0
        %v528 = vsel %vm514, %v320, 0
        %v531 = vsel %vm514, %v321, 0
        %v534 = vsel %vm514, %v322, 0
        %v537 = vsel %vm514, %v323, 0
        %v540 = vsel %vm514, %v324, 0
        %542 = vmatpush.msra.mxu0 0.0
        %543 = vmatpush.msra.mxu0 0.0
        %544 = vmatpush.msra.mxu0 0.0
        %545 = vmatpush.msra.mxu0 0.0
        %546 = vmatpush.msra.mxu0 0.0
        %547 = vmatpush.msra.mxu0 0.0
        %548 = vmatpush.msra.mxu0 0.0
        %549 = vmatpush.msra.mxu0 0.0
        %550 = vmatpush.msra.mxu0 0.0
        %551 = vmatpush.msra.mxu0 0.0
        %552 = vmatpush.msra.mxu0 0.0
        %553 = vmatpush.msra.mxu0 0.0
        %554 = vmatpush.msra.mxu0 %v467
        %555 = vmatpush.msra.mxu0 %v465
        %556 = vmatpush.msra.mxu0 %v463
        %557 = vmatpush.msra.mxu0 %v461
        %558 = vmatmul.f32.gmra.mxu0 %v516
        %v559 = vpop.f32.mrf.mxu0
        %v560 = vadd.f32 %v472, %v559
        %561 = vmatmul.f32.gmra.mxu0 %v519
        %v562 = vpop.f32.mrf.mxu0
        %v563 = vadd.f32 %v477, %v562
        %564 = vmatmul.f32.gmra.mxu0 %v522
        %v565 = vpop.f32.mrf.mxu0
        %v566 = vadd.f32 %v482, %v565
        %567 = vmatmul.f32.gmra.mxu0 %v525
        %v568 = vpop.f32.mrf.mxu0
        %v569 = vadd.f32 %v487, %v568
        %570 = vmatmul.f32.gmra.mxu0 %v528
        %v571 = vpop.f32.mrf.mxu0
        %v572 = vadd.f32 %v492, %v571
        %573 = vmatmul.f32.gmra.mxu0 %v531
        %v574 = vpop.f32.mrf.mxu0
        %v575 = vadd.f32 %v497, %v574
        %576 = vmatmul.f32.gmra.mxu0 %v534
        %v577 = vpop.f32.mrf.mxu0
        %v578 = vadd.f32 %v502, %v577
        %579 = vmatmul.f32.gmra.mxu0 %v537
        %v580 = vpop.f32.mrf.mxu0
        %v581 = vadd.f32 %v507, %v580
        %582 = vmatmul.f32.gmra.mxu0 %v540
        %v583 = vpop.f32.mrf.mxu0
        %v584 = vadd.f32 %v512, %v583
        %585 = vdwg.mxu0
        %586 = vmatpush.msra.mxu0 0.0
        %587 = vmatpush.msra.mxu0 0.0
        %588 = vmatpush.msra.mxu0 0.0
        %589 = vmatpush.msra.mxu0 0.0
        %590 = vmatpush.msra.mxu0 0.0
        %591 = vmatpush.msra.mxu0 0.0
        %592 = vmatpush.msra.mxu0 0.0
        %593 = vmatpush.msra.mxu0 0.0
        %594 = vmatpush.msra.mxu0 0.0
        %595 = vmatpush.msra.mxu0 0.0
        %596 = vmatpush.msra.mxu0 0.0
        %597 = vmatpush.msra.mxu0 0.0
        %598 = vmatpush.msra.mxu0 %v468
        %599 = vmatpush.msra.mxu0 %v466
        %600 = vmatpush.msra.mxu0 %v464
        %601 = vmatpush.msra.mxu0 %v462
        %602 = vmatmul.f32.gmra.mxu0 %v516
        %v603 = vpop.f32.mrf.mxu0
        %v604 = vadd.f32 %v472, %v603
        %605 = vmatmul.f32.gmra.mxu0 %v519
        %v606 = vpop.f32.mrf.mxu0
        %v607 = vadd.f32 %v477, %v606
        %608 = vmatmul.f32.gmra.mxu0 %v522
        %v609 = vpop.f32.mrf.mxu0
        %v610 = vadd.f32 %v482, %v609
        %611 = vmatmul.f32.gmra.mxu0 %v525
        %v612 = vpop.f32.mrf.mxu0
        %v613 = vadd.f32 %v487, %v612
        %614 = vmatmul.f32.gmra.mxu0 %v528
        %v615 = vpop.f32.mrf.mxu0
        %v616 = vadd.f32 %v492, %v615
        %617 = vmatmul.f32.gmra.mxu0 %v531
        %v618 = vpop.f32.mrf.mxu0
        %v619 = vadd.f32 %v497, %v618
        %620 = vmatmul.f32.gmra.mxu0 %v534
        %v621 = vpop.f32.mrf.mxu0
        %v622 = vadd.f32 %v502, %v621
        %623 = vmatmul.f32.gmra.mxu0 %v537
        %v624 = vpop.f32.mrf.mxu0
        %v625 = vadd.f32 %v507, %v624
        %626 = vmatmul.f32.gmra.mxu0 %v540
        %v627 = vpop.f32.mrf.mxu0
        %v628 = vadd.f32 %v512, %v627
        %629 = vdwg.mxu0
        %v630 = vxor.u32 %v560, 2147483648
        %v631 = vxor.u32 %v604, 2147483648
        %v632 = vxor.u32 %v563, 2147483648
        %v633 = vxor.u32 %v607, 2147483648
        %v634 = vxor.u32 %v566, 2147483648
        %v635 = vxor.u32 %v610, 2147483648
        %v636 = vxor.u32 %v569, 2147483648
        %v637 = vxor.u32 %v613, 2147483648
        %v638 = vxor.u32 %v572, 2147483648
        %v639 = vxor.u32 %v616, 2147483648
        %v640 = vxor.u32 %v575, 2147483648
        %v641 = vxor.u32 %v619, 2147483648
        %v642 = vxor.u32 %v578, 2147483648
        %v643 = vxor.u32 %v622, 2147483648
        %v644 = vxor.u32 %v581, 2147483648
        %v645 = vxor.u32 %v625, 2147483648
        %v646 = vxor.u32 %v584, 2147483648
        %v647 = vxor.u32 %v628, 2147483648
        %v648 = vmul.f32 %v630, 1.442695
        %v649 = vpow.pop %v648
        %v650 = vmul.f32 %v631, 1.442695
        %v651 = vpow.pop %v650
        %v652 = vmul.f32 %v632, 1.442695
        %v653 = vpow.pop %v652
        %v654 = vmul.f32 %v633, 1.442695
        %v655 = vpow.pop %v654
        %v656 = vmul.f32 %v634, 1.442695
        %v657 = vpow.pop %v656
        %v658 = vmul.f32 %v635, 1.442695
        %v659 = vpow.pop %v658
        %v660 = vmul.f32 %v636, 1.442695
        %v661 = vpow.pop %v660
        %v662 = vmul.f32 %v637, 1.442695
        %v663 = vpow.pop %v662
        %v664 = vmul.f32 %v638, 1.442695
        %v665 = vpow.pop %v664
        %v666 = vmul.f32 %v639, 1.442695
        %v667 = vpow.pop %v666
        %v668 = vmul.f32 %v640, 1.442695
        %v669 = vpow.pop %v668
        %v670 = vmul.f32 %v641, 1.442695
        %v671 = vpow.pop %v670
        %v672 = vmul.f32 %v642, 1.442695
        %v673 = vpow.pop %v672
        %v674 = vmul.f32 %v643, 1.442695
        %v675 = vpow.pop %v674
        %v676 = vmul.f32 %v644, 1.442695
        %v677 = vpow.pop %v676
        %v678 = vmul.f32 %v645, 1.442695
        %v679 = vpow.pop %v678
        %v680 = vmul.f32 %v646, 1.442695
        %v681 = vpow.pop %v680
        %v682 = vmul.f32 %v647, 1.442695
        %v683 = vpow.pop %v682
        %v684 = vadd.f32 %v649, 1.0
        %v685 = vadd.f32 %v651, 1.0
        %v686 = vadd.f32 %v653, 1.0
        %v687 = vadd.f32 %v655, 1.0
        %v688 = vadd.f32 %v657, 1.0
        %v689 = vadd.f32 %v659, 1.0
        %v690 = vadd.f32 %v661, 1.0
        %v691 = vadd.f32 %v663, 1.0
        %v692 = vadd.f32 %v665, 1.0
        %v693 = vadd.f32 %v667, 1.0
        %v694 = vadd.f32 %v669, 1.0
        %v695 = vadd.f32 %v671, 1.0
        %v696 = vadd.f32 %v673, 1.0
        %v697 = vadd.f32 %v675, 1.0
        %v698 = vadd.f32 %v677, 1.0
        %v699 = vadd.f32 %v679, 1.0
        %v700 = vadd.f32 %v681, 1.0
        %v701 = vadd.f32 %v683, 1.0
        %v702 = vrcp.pop %v684
        %v703 = vmul.f32 %v684, %v702
        %v704 = vsub.f32 1.0, %v703
        %v705 = vmul.f32 %v702, %v704
        %v706 = vadd.f32 %v702, %v705
        %vm707 = vweird.f32 %v684
        %vm708 = vweird.f32 %v702
        %vm709 = vmor %vm707, %vm708
        %v710 = vsel %vm709, %v702, %v706
        %v711 = vand.u32 2147483647, %v684
        %vm712 = vcmp.eq.f32.partialorder %v711, 8.507059e+37
        %v713 = vand.u32 %v684, 2147483648
        %v714 = vor.u32 1.1754944e-38, %v713
        %v715 = vsel %vm712, %v714, %v710
        %v716 = vmul.f32 1.0, %v715
        %v717 = vrcp.pop %v685
        %v718 = vmul.f32 %v685, %v717
        %v719 = vsub.f32 1.0, %v718
        %v720 = vmul.f32 %v717, %v719
        %v721 = vadd.f32 %v717, %v720
        %vm722 = vweird.f32 %v685
        %vm723 = vweird.f32 %v717
        %vm724 = vmor %vm722, %vm723
        %v725 = vsel %vm724, %v717, %v721
        %v726 = vand.u32 2147483647, %v685
        %vm727 = vcmp.eq.f32.partialorder %v726, 8.507059e+37
        %v728 = vand.u32 %v685, 2147483648
        %v729 = vor.u32 1.1754944e-38, %v728
        %v730 = vsel %vm727, %v729, %v725
        %v731 = vmul.f32 1.0, %v730
        %v732 = vrcp.pop %v686
        %v733 = vmul.f32 %v686, %v732
        %v734 = vsub.f32 1.0, %v733
        %v735 = vmul.f32 %v732, %v734
        %v736 = vadd.f32 %v732, %v735
        %vm737 = vweird.f32 %v686
        %vm738 = vweird.f32 %v732
        %vm739 = vmor %vm737, %vm738
        %v740 = vsel %vm739, %v732, %v736
        %v741 = vand.u32 2147483647, %v686
        %vm742 = vcmp.eq.f32.partialorder %v741, 8.507059e+37
        %v743 = vand.u32 %v686, 2147483648
        %v744 = vor.u32 1.1754944e-38, %v743
        %v745 = vsel %vm742, %v744, %v740
        %v746 = vmul.f32 1.0, %v745
        %v747 = vrcp.pop %v687
        %v748 = vmul.f32 %v687, %v747
        %v749 = vsub.f32 1.0, %v748
        %v750 = vmul.f32 %v747, %v749
        %v751 = vadd.f32 %v747, %v750
        %vm752 = vweird.f32 %v687
        %vm753 = vweird.f32 %v747
        %vm754 = vmor %vm752, %vm753
        %v755 = vsel %vm754, %v747, %v751
        %v756 = vand.u32 2147483647, %v687
        %vm757 = vcmp.eq.f32.partialorder %v756, 8.507059e+37
        %v758 = vand.u32 %v687, 2147483648
        %v759 = vor.u32 1.1754944e-38, %v758
        %v760 = vsel %vm757, %v759, %v755
        %v761 = vmul.f32 1.0, %v760
        %v762 = vrcp.pop %v688
        %v763 = vmul.f32 %v688, %v762
        %v764 = vsub.f32 1.0, %v763
        %v765 = vmul.f32 %v762, %v764
        %v766 = vadd.f32 %v762, %v765
        %vm767 = vweird.f32 %v688
        %vm768 = vweird.f32 %v762
        %vm769 = vmor %vm767, %vm768
        %v770 = vsel %vm769, %v762, %v766
        %v771 = vand.u32 2147483647, %v688
        %vm772 = vcmp.eq.f32.partialorder %v771, 8.507059e+37
        %v773 = vand.u32 %v688, 2147483648
        %v774 = vor.u32 1.1754944e-38, %v773
        %v775 = vsel %vm772, %v774, %v770
        %v776 = vmul.f32 1.0, %v775
        %v777 = vrcp.pop %v689
        %v778 = vmul.f32 %v689, %v777
        %v779 = vsub.f32 1.0, %v778
        %v780 = vmul.f32 %v777, %v779
        %v781 = vadd.f32 %v777, %v780
        %vm782 = vweird.f32 %v689
        %vm783 = vweird.f32 %v777
        %vm784 = vmor %vm782, %vm783
        %v785 = vsel %vm784, %v777, %v781
        %v786 = vand.u32 2147483647, %v689
        %vm787 = vcmp.eq.f32.partialorder %v786, 8.507059e+37
        %v788 = vand.u32 %v689, 2147483648
        %v789 = vor.u32 1.1754944e-38, %v788
        %v790 = vsel %vm787, %v789, %v785
        %v791 = vmul.f32 1.0, %v790
        %v792 = vrcp.pop %v690
        %v793 = vmul.f32 %v690, %v792
        %v794 = vsub.f32 1.0, %v793
        %v795 = vmul.f32 %v792, %v794
        %v796 = vadd.f32 %v792, %v795
        %vm797 = vweird.f32 %v690
        %vm798 = vweird.f32 %v792
        %vm799 = vmor %vm797, %vm798
        %v800 = vsel %vm799, %v792, %v796
        %v801 = vand.u32 2147483647, %v690
        %vm802 = vcmp.eq.f32.partialorder %v801, 8.507059e+37
        %v803 = vand.u32 %v690, 2147483648
        %v804 = vor.u32 1.1754944e-38, %v803
        %v805 = vsel %vm802, %v804, %v800
        %v806 = vmul.f32 1.0, %v805
        %v807 = vrcp.pop %v691
        %v808 = vmul.f32 %v691, %v807
        %v809 = vsub.f32 1.0, %v808
        %v810 = vmul.f32 %v807, %v809
        %v811 = vadd.f32 %v807, %v810
        %vm812 = vweird.f32 %v691
        %vm813 = vweird.f32 %v807
        %vm814 = vmor %vm812, %vm813
        %v815 = vsel %vm814, %v807, %v811
        %v816 = vand.u32 2147483647, %v691
        %vm817 = vcmp.eq.f32.partialorder %v816, 8.507059e+37
        %v818 = vand.u32 %v691, 2147483648
        %v819 = vor.u32 1.1754944e-38, %v818
        %v820 = vsel %vm817, %v819, %v815
        %v821 = vmul.f32 1.0, %v820
        %v822 = vrcp.pop %v692
        %v823 = vmul.f32 %v692, %v822
        %v824 = vsub.f32 1.0, %v823
        %v825 = vmul.f32 %v822, %v824
        %v826 = vadd.f32 %v822, %v825
        %vm827 = vweird.f32 %v692
        %vm828 = vweird.f32 %v822
        %vm829 = vmor %vm827, %vm828
        %v830 = vsel %vm829, %v822, %v826
        %v831 = vand.u32 2147483647, %v692
        %vm832 = vcmp.eq.f32.partialorder %v831, 8.507059e+37
        %v833 = vand.u32 %v692, 2147483648
        %v834 = vor.u32 1.1754944e-38, %v833
        %v835 = vsel %vm832, %v834, %v830
        %v836 = vmul.f32 1.0, %v835
        %v837 = vrcp.pop %v693
        %v838 = vmul.f32 %v693, %v837
        %v839 = vsub.f32 1.0, %v838
        %v840 = vmul.f32 %v837, %v839
        %v841 = vadd.f32 %v837, %v840
        %vm842 = vweird.f32 %v693
        %vm843 = vweird.f32 %v837
        %vm844 = vmor %vm842, %vm843
        %v845 = vsel %vm844, %v837, %v841
        %v846 = vand.u32 2147483647, %v693
        %vm847 = vcmp.eq.f32.partialorder %v846, 8.507059e+37
        %v848 = vand.u32 %v693, 2147483648
        %v849 = vor.u32 1.1754944e-38, %v848
        %v850 = vsel %vm847, %v849, %v845
        %v851 = vmul.f32 1.0, %v850
        %v852 = vrcp.pop %v694
        %v853 = vmul.f32 %v694, %v852
        %v854 = vsub.f32 1.0, %v853
        %v855 = vmul.f32 %v852, %v854
        %v856 = vadd.f32 %v852, %v855
        %vm857 = vweird.f32 %v694
        %vm858 = vweird.f32 %v852
        %vm859 = vmor %vm857, %vm858
        %v860 = vsel %vm859, %v852, %v856
        %v861 = vand.u32 2147483647, %v694
        %vm862 = vcmp.eq.f32.partialorder %v861, 8.507059e+37
        %v863 = vand.u32 %v694, 2147483648
        %v864 = vor.u32 1.1754944e-38, %v863
        %v865 = vsel %vm862, %v864, %v860
        %v866 = vmul.f32 1.0, %v865
        %v867 = vrcp.pop %v695
        %v868 = vmul.f32 %v695, %v867
        %v869 = vsub.f32 1.0, %v868
        %v870 = vmul.f32 %v867, %v869
        %v871 = vadd.f32 %v867, %v870
        %vm872 = vweird.f32 %v695
        %vm873 = vweird.f32 %v867
        %vm874 = vmor %vm872, %vm873
        %v875 = vsel %vm874, %v867, %v871
        %v876 = vand.u32 2147483647, %v695
        %vm877 = vcmp.eq.f32.partialorder %v876, 8.507059e+37
        %v878 = vand.u32 %v695, 2147483648
        %v879 = vor.u32 1.1754944e-38, %v878
        %v880 = vsel %vm877, %v879, %v875
        %v881 = vmul.f32 1.0, %v880
        %v882 = vrcp.pop %v696
        %v883 = vmul.f32 %v696, %v882
        %v884 = vsub.f32 1.0, %v883
        %v885 = vmul.f32 %v882, %v884
        %v886 = vadd.f32 %v882, %v885
        %vm887 = vweird.f32 %v696
        %vm888 = vweird.f32 %v882
        %vm889 = vmor %vm887, %vm888
        %v890 = vsel %vm889, %v882, %v886
        %v891 = vand.u32 2147483647, %v696
        %vm892 = vcmp.eq.f32.partialorder %v891, 8.507059e+37
        %v893 = vand.u32 %v696, 2147483648
        %v894 = vor.u32 1.1754944e-38, %v893
        %v895 = vsel %vm892, %v894, %v890
        %v896 = vmul.f32 1.0, %v895
        %v897 = vrcp.pop %v697
        %v898 = vmul.f32 %v697, %v897
        %v899 = vsub.f32 1.0, %v898
        %v900 = vmul.f32 %v897, %v899
        %v901 = vadd.f32 %v897, %v900
        %vm902 = vweird.f32 %v697
        %vm903 = vweird.f32 %v897
        %vm904 = vmor %vm902, %vm903
        %v905 = vsel %vm904, %v897, %v901
        %v906 = vand.u32 2147483647, %v697
        %vm907 = vcmp.eq.f32.partialorder %v906, 8.507059e+37
        %v908 = vand.u32 %v697, 2147483648
        %v909 = vor.u32 1.1754944e-38, %v908
        %v910 = vsel %vm907, %v909, %v905
        %v911 = vmul.f32 1.0, %v910
        %v912 = vrcp.pop %v698
        %v913 = vmul.f32 %v698, %v912
        %v914 = vsub.f32 1.0, %v913
        %v915 = vmul.f32 %v912, %v914
        %v916 = vadd.f32 %v912, %v915
        %vm917 = vweird.f32 %v698
        %vm918 = vweird.f32 %v912
        %vm919 = vmor %vm917, %vm918
        %v920 = vsel %vm919, %v912, %v916
        %v921 = vand.u32 2147483647, %v698
        %vm922 = vcmp.eq.f32.partialorder %v921, 8.507059e+37
        %v923 = vand.u32 %v698, 2147483648
        %v924 = vor.u32 1.1754944e-38, %v923
        %v925 = vsel %vm922, %v924, %v920
        %v926 = vmul.f32 1.0, %v925
        %v927 = vrcp.pop %v699
        %v928 = vmul.f32 %v699, %v927
        %v929 = vsub.f32 1.0, %v928
        %v930 = vmul.f32 %v927, %v929
        %v931 = vadd.f32 %v927, %v930
        %vm932 = vweird.f32 %v699
        %vm933 = vweird.f32 %v927
        %vm934 = vmor %vm932, %vm933
        %v935 = vsel %vm934, %v927, %v931
        %v936 = vand.u32 2147483647, %v699
        %vm937 = vcmp.eq.f32.partialorder %v936, 8.507059e+37
        %v938 = vand.u32 %v699, 2147483648
        %v939 = vor.u32 1.1754944e-38, %v938
        %v940 = vsel %vm937, %v939, %v935
        %v941 = vmul.f32 1.0, %v940
        %v942 = vrcp.pop %v700
        %v943 = vmul.f32 %v700, %v942
        %v944 = vsub.f32 1.0, %v943
        %v945 = vmul.f32 %v942, %v944
        %v946 = vadd.f32 %v942, %v945
        %vm947 = vweird.f32 %v700
        %vm948 = vweird.f32 %v942
        %vm949 = vmor %vm947, %vm948
        %v950 = vsel %vm949, %v942, %v946
        %v951 = vand.u32 2147483647, %v700
        %vm952 = vcmp.eq.f32.partialorder %v951, 8.507059e+37
        %v953 = vand.u32 %v700, 2147483648
        %v954 = vor.u32 1.1754944e-38, %v953
        %v955 = vsel %vm952, %v954, %v950
        %v956 = vmul.f32 1.0, %v955
        %v957 = vrcp.pop %v701
        %v958 = vmul.f32 %v701, %v957
        %v959 = vsub.f32 1.0, %v958
        %v960 = vmul.f32 %v957, %v959
        %v961 = vadd.f32 %v957, %v960
        %vm962 = vweird.f32 %v701
        %vm963 = vweird.f32 %v957
        %vm964 = vmor %vm962, %vm963
        %v965 = vsel %vm964, %v957, %v961
        %v966 = vand.u32 2147483647, %v701
        %vm967 = vcmp.eq.f32.partialorder %v966, 8.507059e+37
        %v968 = vand.u32 %v701, 2147483648
        %v969 = vor.u32 1.1754944e-38, %v968
        %v970 = vsel %vm967, %v969, %v965
        %v971 = vmul.f32 1.0, %v970
        %973 = vset.pattern.permute.xlu0 0
        %974 = vperm.xlu0 %973, %v343
        %v975 = vpop.permute.xlu0 %974
        %978 = vset.pattern.permute.xlu0 0
        %979 = vperm.xlu0 %978, %v344
        %v980 = vpop.permute.xlu0 %979
        %983 = vset.pattern.permute.xlu0 0
        %984 = vperm.xlu0 %983, %v345
        %v985 = vpop.permute.xlu0 %984
        %988 = vset.pattern.permute.xlu0 0
        %989 = vperm.xlu0 %988, %v346
        %v990 = vpop.permute.xlu0 %989
        %993 = vset.pattern.permute.xlu0 0
        %994 = vperm.xlu0 %993, %v347
        %v995 = vpop.permute.xlu0 %994
        %998 = vset.pattern.permute.xlu0 0
        %999 = vperm.xlu0 %998, %v348
        %v1000 = vpop.permute.xlu0 %999
        %1003 = vset.pattern.permute.xlu0 0
        %1004 = vperm.xlu0 %1003, %v349
        %v1005 = vpop.permute.xlu0 %1004
        %1008 = vset.pattern.permute.xlu0 0
        %1009 = vperm.xlu0 %1008, %v350
        %v1010 = vpop.permute.xlu0 %1009
        %1013 = vset.pattern.permute.xlu0 0
        %1014 = vperm.xlu0 %1013, %v351
        %v1015 = vpop.permute.xlu0 %1014
        %v1017 = vadd.f32 %v716, %v975
        %v1018 = vadd.f32 %v731, %v975
        %v1019 = vadd.f32 %v746, %v980
        %v1020 = vadd.f32 %v761, %v980
        %v1021 = vadd.f32 %v776, %v985
        %v1022 = vadd.f32 %v791, %v985
        %v1023 = vadd.f32 %v806, %v990
        %v1024 = vadd.f32 %v821, %v990
        %v1025 = vadd.f32 %v836, %v995
        %v1026 = vadd.f32 %v851, %v995
        %v1027 = vadd.f32 %v866, %v1000
        %v1028 = vadd.f32 %v881, %v1000
        %v1029 = vadd.f32 %v896, %v1005
        %v1030 = vadd.f32 %v911, %v1005
        %v1031 = vadd.f32 %v926, %v1010
        %v1032 = vadd.f32 %v941, %v1010
        %v1033 = vadd.f32 %v956, %v1015
        %v1034 = vadd.f32 %v971, %v1015
        %v1035 = vsub.f32 %v1017, %v560
        %v1036 = vsub.f32 %v1018, %v604
        %v1037 = vsub.f32 %v1019, %v563
        %v1038 = vsub.f32 %v1020, %v607
        %v1039 = vsub.f32 %v1021, %v566
        %v1040 = vsub.f32 %v1022, %v610
        %v1041 = vsub.f32 %v1023, %v569
        %v1042 = vsub.f32 %v1024, %v613
        %v1043 = vsub.f32 %v1025, %v572
        %v1044 = vsub.f32 %v1026, %v616
        %v1045 = vsub.f32 %v1027, %v575
        %v1046 = vsub.f32 %v1028, %v619
        %v1047 = vsub.f32 %v1029, %v578
        %v1048 = vsub.f32 %v1030, %v622
        %v1049 = vsub.f32 %v1031, %v581
        %v1050 = vsub.f32 %v1032, %v625
        %v1051 = vsub.f32 %v1033, %v584
        %v1052 = vsub.f32 %v1034, %v628
        %1054 = vset.pattern.permute.xlu0 0
        %1055 = vperm.xlu0 %1054, %v334
        %v1056 = vpop.permute.xlu0 %1055
        %1059 = vset.pattern.permute.xlu0 0
        %1060 = vperm.xlu0 %1059, %v335
        %v1061 = vpop.permute.xlu0 %1060
        %1064 = vset.pattern.permute.xlu0 0
        %1065 = vperm.xlu0 %1064, %v336
        %v1066 = vpop.permute.xlu0 %1065
        %1069 = vset.pattern.permute.xlu0 0
        %1070 = vperm.xlu0 %1069, %v337
        %v1071 = vpop.permute.xlu0 %1070
        %1074 = vset.pattern.permute.xlu0 0
        %1075 = vperm.xlu0 %1074, %v338
        %v1076 = vpop.permute.xlu0 %1075
        %1079 = vset.pattern.permute.xlu0 0
        %1080 = vperm.xlu0 %1079, %v339
        %v1081 = vpop.permute.xlu0 %1080
        %1084 = vset.pattern.permute.xlu0 0
        %1085 = vperm.xlu0 %1084, %v340
        %v1086 = vpop.permute.xlu0 %1085
        %1089 = vset.pattern.permute.xlu0 0
        %1090 = vperm.xlu0 %1089, %v341
        %v1091 = vpop.permute.xlu0 %1090
        %1094 = vset.pattern.permute.xlu0 0
        %1095 = vperm.xlu0 %1094, %v342
        %v1096 = vpop.permute.xlu0 %1095
        %v1098 = vmul.f32 %v1056, %v1035
        %v1099 = vmul.f32 %v1056, %v1036
        %v1100 = vmul.f32 %v1061, %v1037
        %v1101 = vmul.f32 %v1061, %v1038
        %v1102 = vmul.f32 %v1066, %v1039
        %v1103 = vmul.f32 %v1066, %v1040
        %v1104 = vmul.f32 %v1071, %v1041
        %v1105 = vmul.f32 %v1071, %v1042
        %v1106 = vmul.f32 %v1076, %v1043
        %v1107 = vmul.f32 %v1076, %v1044
        %v1108 = vmul.f32 %v1081, %v1045
        %v1109 = vmul.f32 %v1081, %v1046
        %v1110 = vmul.f32 %v1086, %v1047
        %v1111 = vmul.f32 %v1086, %v1048
        %v1112 = vmul.f32 %v1091, %v1049
        %v1113 = vmul.f32 %v1091, %v1050
        %v1114 = vmul.f32 %v1096, %v1051
        %v1115 = vmul.f32 %v1096, %v1052
        %v1116 = vadd.f32 %v560, %v1098
        %v1117 = vadd.f32 %v604, %v1099
        %v1118 = vadd.f32 %v563, %v1100
        %v1119 = vadd.f32 %v607, %v1101
        %v1120 = vadd.f32 %v566, %v1102
        %v1121 = vadd.f32 %v610, %v1103
        %v1122 = vadd.f32 %v569, %v1104
        %v1123 = vadd.f32 %v613, %v1105
        %v1124 = vadd.f32 %v572, %v1106
        %v1125 = vadd.f32 %v616, %v1107
        %v1126 = vadd.f32 %v575, %v1108
        %v1127 = vadd.f32 %v619, %v1109
        %v1128 = vadd.f32 %v578, %v1110
        %v1129 = vadd.f32 %v622, %v1111
        %v1130 = vadd.f32 %v581, %v1112
        %v1131 = vadd.f32 %v625, %v1113
        %v1132 = vadd.f32 %v584, %v1114
        %v1133 = vadd.f32 %v628, %v1115
        %1134 = vst [vmem:[%s296] sm:$0xff] %v1116
        %1135 = vst [vmem:[%s296 + $0x8] sm:$0xff] %v1117
        %1136 = vst [vmem:[%s296 + $0x10] sm:$0xff] %v1118
        %1137 = vst [vmem:[%s296 + $0x18] sm:$0xff] %v1119
        %1138 = vst [vmem:[%s296 + $0x20] sm:$0xff] %v1120
        %1139 = vst [vmem:[%s296 + $0x28] sm:$0xff] %v1121
        %1140 = vst [vmem:[%s296 + $0x30] sm:$0xff] %v1122
        %1141 = vst [vmem:[%s296 + $0x38] sm:$0xff] %v1123
        %1142 = vst [vmem:[%s296 + $0x40] sm:$0xff] %v1124
        %1143 = vst [vmem:[%s296 + $0x48] sm:$0xff] %v1125
        %1144 = vst [vmem:[%s296 + $0x50] sm:$0xff] %v1126
        %1145 = vst [vmem:[%s296 + $0x58] sm:$0xff] %v1127
        %1146 = vst [vmem:[%s296 + $0x60] sm:$0xff] %v1128
        %1147 = vst [vmem:[%s296 + $0x68] sm:$0xff] %v1129
        %1148 = vst [vmem:[%s296 + $0x70] sm:$0xff] %v1130
        %1149 = vst [vmem:[%s296 + $0x78] sm:$0xff] %v1131
        %1150 = vst [vmem:[%s296 + $0x80] sm:$0xff] %v1132
        %1151 = vst [vmem:[%s296 + $0x88] sm:$0xff] %v1133
        %s1152 = sand.u32 %s197, 1
        %s1153 = scalar_lea.sflag [#allocation3], %s1152
        %s1154 = sand.u32 %s197, 1
        %s1155 = smul.addr %s1154, 144
        %s1156 = scalar_lea.vmem [#allocation2], %s1155
        // Predicated region
        $region49: #{tpu_custom_call.1} parent=47 // pred_check
          %p1157 = pneg %p207
        $region50: #{tpu_custom_call.1} parent=47 // pred_check_branch
          %1159 = sbr.rel (%p1157) target = $region52
        $region51: #{tpu_custom_call.1} parent=47 // pred_region
          %s1160 = smul.u32 2, %s26
          %1162 = vsyncadd %s1153, 0
          %s1163 = smul.addr %s25, 18
          %s1164 = sadd.s32 %s1160, %s1163
          %s1165 = smul.addr %s1164, 8
          %s1166 = scalar_lea.hbm %s7, %s1165
          %s1167 = sshll.u32 %s1156, 4
          %s1168 = int_to_ptr.vmem [resolvable:$true] %s1167
          %s1169 = sshll.u32 %s1166, 4
          %s1170 = int_to_ptr.hbm [resolvable:$true] %s1169
          %1175 = dma.vmem_to_hbm [thread:$0]  %s1168, 2304, %s1170, %s1153, 256, 256, 16
        $region52: #{tpu_custom_call.1} parent=47 // pred_fallthru
          _
      $region48: #{tpu_custom_call.1} parent=5 // pred_fallthru
        _
      %p1176 = scmp.le.s32.totalorder 2, %s16
      // Predicated region
      $region53: #{tpu_custom_call.1} parent=5 // pred_check
        %p1177 = pneg %p1176
      $region54: #{tpu_custom_call.1} parent=5 // pred_check_branch
        %1179 = sbr.rel (%p1177) target = $region56
      $region55: #{tpu_custom_call.1} parent=5 // pred_region
        %s1180 = ssub.s32 %s16, 2
        // Predicated region
        $region57: #{tpu_custom_call.1} parent=55 // pred_check
          %p1181 = pneg %p213
        $region58: #{tpu_custom_call.1} parent=55 // pred_check_branch
          %1183 = sbr.rel (%p1181) target = $region60
        $region59: #{tpu_custom_call.1} parent=55 // pred_region
          %s1184 = sand.u32 %s198, 1
          %s1185 = scalar_lea.sflag [#allocation3], %s1184
          %s1186 = sand.u32 %s198, 1
          %s1187 = smul.addr %s1186, 144
          %s1188 = scalar_lea.vmem [#allocation2], %s1187
          %1190 = dma.done %s1185, 2304
        $region60: #{tpu_custom_call.1} parent=55 // pred_fallthru
          _
      $region56: #{tpu_custom_call.1} parent=5 // pred_fallthru
        _
    $region6: #{tpu_custom_call.1} parent=1 // loop_footer
      %s20 = sadd.s32 1, %s16
    $region7: #{tpu_custom_call.1} parent=1 // loop_footer_branch
      %15 = sbr.rel target = $region3
    $region8: #{tpu_custom_call.1} parent=1 // loop_exit
      _
    %1191 = vsyncpa [#allocation3], 1
    %s1192 = scalar_lea.sflag [#allocation3], 1
    %1193 = vsyncpa %s1192, 1

</llo_original>
